<compile_context>
chip_gen: v5e
topology: v5e:2x2
jax: 0.10.0
libtpu: 0.0.40
codegen_flags: <defaults>
</compile_context>

<pallas_src>
import math
from functools import partial
from typing import NamedTuple

import jax
import jax.numpy as jnp
from jax.experimental import pallas as pl
from jax.experimental.pallas import tpu as pltpu


def _round_up(a: int, b: int) -> int:
    return (a + b - 1) // b * b


def _physical_vmem_bytes() -> int:
    """Best-effort query of per-core VMEM; conservative fallback (v7x = 64 MiB)."""
    try:
        info = pltpu.get_tpu_info()
        for name in ("vmem_capacity_bytes", "vmem_size_bytes", "vmem_bytes"):
            v = getattr(info, name, None)
            if isinstance(v, int) and v > 0:
                return int(v)
    except Exception:
        pass
    return 64 << 20


class PackedMLPWeights(NamedTuple):
    """Pre-packed LlamaMLP weights (build once at weight-load time)."""
    w12: jax.Array      # (n_embd, 2*hidden_p): [w1_c | w2_c] interleaved per gate_chunk
    wo: jax.Array       # (hidden_p, n_embd):   c_proj.weight.T, rows zero-padded
    h_tile: int         # hidden-tile size used by the grid (multiple of gate_chunk)
    gate_chunk: int     # gate-math chunk width (multiple of 128)


def pack_llama_mlp_weights(w1_t, w2_t, wo_t, *, h_tile=512, gate_chunk=512):
    """Pack w1.T/w2.T into one interleaved slab and pad hidden to a tile multiple.

    w1_t, w2_t: (n_embd, hidden)   == w1.weight.T / w2.weight.T
    wo_t:       (hidden, n_embd)   == c_proj.weight.T
    Padded hidden columns/rows are zero, so silu(0)*0 contributes nothing.
    """
    n_embd, hidden = w1_t.shape
    g = max(128, (min(gate_chunk, h_tile) // 128) * 128)
    ht = max(g, (h_tile // g) * g)              # h_tile as a multiple of gate_chunk
    hidden_p = _round_up(hidden, ht)
    if hidden_p != hidden:
        pad = hidden_p - hidden
        w1_t = jnp.pad(w1_t, ((0, 0), (0, pad)))
        w2_t = jnp.pad(w2_t, ((0, 0), (0, pad)))
        wo_t = jnp.pad(wo_t, ((0, pad), (0, 0)))
    n_chunks = hidden_p // g
    w12 = jnp.stack(
        [w1_t.reshape(n_embd, n_chunks, g), w2_t.reshape(n_embd, n_chunks, g)],
        axis=2,
    ).reshape(n_embd, 2 * hidden_p)
    return PackedMLPWeights(w12=w12, wo=wo_t, h_tile=ht, gate_chunk=g)


def _mlp_kernel(x_ref, w12_ref, wo_ref, o_ref, acc_ref, *, gate_chunk):
    # x_ref:   (tm, n_embd)        activation tile (constant across the h axis)
    # w12_ref: (n_embd, 2*h_tile)  [w1|w2] columns for this hidden tile
    # wo_ref:  (h_tile, n_embd)    c_proj rows for this hidden tile
    # o_ref:   (tm, n_embd)        output tile (written on the last h step)
    # acc_ref: (tm, n_embd) f32    VMEM accumulator across hidden tiles
    h = pl.program_id(1)

    @pl.when(h == 0)
    def _():
        acc_ref[...] = jnp.zeros_like(acc_ref)

    h_tile = wo_ref.shape[0]
    g = gate_chunk
    n_chunks = h_tile // g
    # NOTE: activations are cast to the weight dtype for the MXU (bf16 weights ->
    # bf16 activation feed); accumulation is f32 via preferred_element_type.
    x = x_ref[...].astype(w12_ref.dtype)

    # Chunked gate math: per chunk one wide matmul for both projections, f32
    # silu/gating on VPU/EUP, then accumulate the c_proj partial.  Keeps f32
    # intermediates to (tm, 2*g) + (tm, g) instead of the whole hidden tile.
    for c in range(n_chunks):
        col0 = 2 * c * g
        hh = jnp.dot(x, w12_ref[:, col0:col0 + 2 * g],
                     preferred_element_type=jnp.float32)
        h1 = hh[:, :g]
        h2 = hh[:, g:]
        gated = (h1 * jax.nn.sigmoid(h1)) * h2
        acc_ref[...] += jnp.dot(
            gated.astype(wo_ref.dtype), wo_ref[c * g:(c + 1) * g, :],
            preferred_element_type=jnp.float32,
        )

    @pl.when(h == pl.num_programs(1) - 1)
    def _():
        o_ref[...] = acc_ref[...].astype(o_ref.dtype)


def llama_mlp_pallas(x, weights: PackedMLPWeights, *, tm=512):
    """SwiGLU MLP forward.

    x:       (..., n_embd) activations (any leading dims; flattened to tokens)
    weights: PackedMLPWeights from pack_llama_mlp_weights()
    Returns same shape as x, in x.dtype.
    """
    *lead, n_embd = x.shape
    M = 1
    for d in lead:
        M *= d
    w12, wo, h_eff, g = weights
    hidden_p = wo.shape[0]
    assert w12.shape == (n_embd, 2 * hidden_p)
    assert hidden_p % h_eff == 0 and h_eff % g == 0
    n_h = hidden_p // h_eff

    # --- row-tile selection ------------------------------------------------
    xb = jnp.dtype(x.dtype).itemsize
    min_align = 16 if xb < 4 else 8            # bf16 packs 16 sublanes per vreg
    tm_eff = max(min_align, min(tm, _round_up(M, min_align)))
    tm_eff = _round_up(tm_eff, min_align)
    Mp = _round_up(M, tm_eff)

    # --- pack activations ----------------------------------------------------
    x2d = x.reshape(M, n_embd)
    if Mp != M:
        x2d = jnp.pad(x2d, ((0, Mp - M), (0, 0)))

    # --- generation-aware VMEM budget ---------------------------------------
    wb = jnp.dtype(w12.dtype).itemsize
    need = (
        2 * tm_eff * n_embd * xb          # x tile (double buffered)
        + 2 * n_embd * 2 * h_eff * wb     # [w1|w2] tile (double buffered)
        + 2 * h_eff * n_embd * wb         # wo tile (double buffered)
        + 2 * tm_eff * n_embd * xb        # out tile (double buffered)
        + tm_eff * n_embd * 4             # f32 accumulator scratch
        + 3 * tm_eff * g * 4              # per-chunk f32 hh/gated intermediates
    )
    phys = _physical_vmem_bytes()
    cap = phys - phys // 8                # 112 MiB on 128 MiB parts, 56 MiB on v7x
    vmem_limit = int(min(max(need * 3 // 2, 16 << 20), cap))

    # --- cost hint for XLA scheduling ----------------------------------------
    flops = 6 * Mp * n_embd * hidden_p            # 2 gate matmuls + c_proj
    transcendentals = Mp * hidden_p               # sigmoid
    bytes_accessed = (
        (w12.size + wo.size) * wb * (Mp // tm_eff)  # weight stream per M tile
        + 2 * Mp * n_embd * xb                      # activations in + out
    )
    cost = pl.CostEstimate(flops=flops, transcendentals=transcendentals,
                           bytes_accessed=bytes_accessed)

    out2d = pl.pallas_call(
        partial(_mlp_kernel, gate_chunk=g),
        out_shape=jax.ShapeDtypeStruct((Mp, n_embd), x.dtype),
        grid_spec=pltpu.PrefetchScalarGridSpec(
            num_scalar_prefetch=0,
            grid=(Mp // tm_eff, n_h),  # token axis first, hidden reduction last
            in_specs=[
                pl.BlockSpec((tm_eff, n_embd), lambda i, h: (i, 0)),      # x (const in h)
                pl.BlockSpec((n_embd, 2 * h_eff), lambda i, h: (0, h)),   # [w1|w2] tile
                pl.BlockSpec((h_eff, n_embd), lambda i, h: (h, 0)),       # wo tile
            ],
            out_specs=pl.BlockSpec((tm_eff, n_embd), lambda i, h: (i, 0)),
            scratch_shapes=[pltpu.VMEM((tm_eff, n_embd), jnp.float32)],
        ),
        compiler_params=pltpu.CompilerParams(
            dimension_semantics=("parallel", "arbitrary"),
            vmem_limit_bytes=vmem_limit,
        ),
        cost_estimate=cost,
    )(x2d, w12, wo)

    if Mp != M:
        out2d = out2d[:M]
    return out2d.reshape(*lead, n_embd)


def _ref_mlp(x2d, w1_t, w2_t, wo_t):
    h1 = jnp.dot(x2d, w1_t, preferred_element_type=jnp.float32)
    h2 = jnp.dot(x2d, w2_t, preferred_element_type=jnp.float32)
    gate = jax.nn.silu(h1) * h2
    return jnp.dot(
        gate.astype(wo_t.dtype), wo_t, preferred_element_type=jnp.float32
    ).astype(x2d.dtype)


if __name__ == "__main__":
    # Config matching LlamaMLP.__init__ math: n_embd=128, multiple_of=128 -> hidden=384
    n_embd = 128
    multiple_of = 128
    hidden = 4 * n_embd
    hidden = int(2 * hidden / 3)
    hidden = multiple_of * ((hidden + multiple_of - 1) // multiple_of)  # -> 384

    B, T = 2, 8
    key = jax.random.PRNGKey(0)
    kx, k1, k2, k3 = jax.random.split(key, 4)

    x = jax.random.normal(kx, (B, T, n_embd), dtype=jnp.float32)
    scale_in = 1.0 / math.sqrt(n_embd)
    scale_hid = 1.0 / math.sqrt(hidden)
    w1_t = jax.random.normal(k1, (n_embd, hidden), dtype=jnp.float32) * scale_in
    w2_t = jax.random.normal(k2, (n_embd, hidden), dtype=jnp.float32) * scale_in
    wo_t = jax.random.normal(k3, (hidden, n_embd), dtype=jnp.float32) * scale_hid

    ref = _ref_mlp(x.reshape(B * T, n_embd), w1_t, w2_t, wo_t).reshape(B, T, n_embd)

    # f32 run with deliberately small tiles: exercises multiple hidden-reduction
    # grid steps, the accumulator init/finalize path, and M-tile iteration.
    packed_small = pack_llama_mlp_weights(w1_t, w2_t, wo_t, h_tile=128, gate_chunk=128)
    out = llama_mlp_pallas(x, packed_small, tm=8)
    out = jax.block_until_ready(out)
    assert out.shape == (B, T, n_embd)
    assert jnp.allclose(out, ref, rtol=1e-4, atol=1e-4), "f32 mismatch vs reference"

    # bf16 weights/activations (production path) with default tiling: exercises
    # the zero-padded hidden (384 -> 512), gate chunking, and the 16-row bf16
    # minimum tile (tm auto-clamped from 512 down to M=16).
    xb16 = x.astype(jnp.bfloat16)
    w1b, w2b, wob = (w.astype(jnp.bfloat16) for w in (w1_t, w2_t, wo_t))
    packed_b = pack_llama_mlp_weights(w1b, w2b, wob)      # h_tile=512, gate_chunk=512
    out_b = llama_mlp_pallas(xb16, packed_b)              # tm default 512 (clamped)
    out_b = jax.block_until_ready(out_b)
    ref_b = _ref_mlp(xb16.reshape(B * T, n_embd), w1b, w2b, wob).reshape(B, T, n_embd)
    err = float(jnp.max(jnp.abs(out_b.astype(jnp.float32) - ref_b.astype(jnp.float32))))
    assert err < 5e-2, f"bf16 mismatch vs reference (max abs err {err})"

    print("KERNEL_OK")
</pallas_src>

<mosaic_0001>
module attributes {stable_mosaic.version = 11 : i64} {
  func.func @_mlp_kernel(%arg0: i32, %arg1: i32, %arg2: memref<8x128xf32, #tpu.memory_space<vmem>>, %arg3: memref<128x256xf32, #tpu.memory_space<vmem>>, %arg4: memref<128x128xf32, #tpu.memory_space<vmem>>, %arg5: memref<8x128xf32, #tpu.memory_space<vmem>>, %arg6: memref<8x128xf32, #tpu.memory_space<vmem>>) attributes {dimension_semantics = [#tpu.dimension_semantics<parallel>, #tpu.dimension_semantics<arbitrary>], iteration_bounds = array<i64: 2, 3>, scalar_prefetch = 0 : i64, scratch_operands = 1 : i64, tpu.core_type = #tpu.core_type<tc>, window_params = [{transform_indices = @transform_0, window_bounds = array<i64: 8, 128>}, {transform_indices = @transform_1, window_bounds = array<i64: 128, 256>}, {transform_indices = @transform_2, window_bounds = array<i64: 128, 128>}, {transform_indices = @transform_3, window_bounds = array<i64: 8, 128>}]} {
    %c0_i32 = arith.constant 0 : i32
    %0 = arith.cmpi eq, %arg1, %c0_i32 : i32
    %1 = arith.extui %0 : i1 to i32
    %c0_i32_0 = arith.constant 0 : i32
    %2 = arith.cmpi ne, %1, %c0_i32_0 : i32
    scf.if %2 {
      %cst_13 = arith.constant 0.000000e+00 : f32
      %23 = vector.broadcast %cst_13 : f32 to vector<8x128xf32>
      %c0_14 = arith.constant 0 : index
      %c0_15 = arith.constant 0 : index
      %24 = vector.load %arg6[%c0_14, %c0_15] : memref<8x128xf32, #tpu.memory_space<vmem>>, vector<8x128xf32>
      tpu.vector_store %arg6[%c0_14, %c0_15], %23 {strides = array<i32>} : memref<8x128xf32, #tpu.memory_space<vmem>>, vector<8x128xf32>,
    } else {
    }
    %c0 = arith.constant 0 : index
    %c0_1 = arith.constant 0 : index
    %3 = vector.load %arg2[%c0, %c0_1] : memref<8x128xf32, #tpu.memory_space<vmem>>, vector<8x128xf32>
    %c0_2 = arith.constant 0 : index
    %c0_3 = arith.constant 0 : index
    %4 = vector.load %arg3[%c0_2, %c0_3] : memref<128x256xf32, #tpu.memory_space<vmem>>, vector<128x256xf32>
    %cst = arith.constant dense<0.000000e+00> : vector<8x256xf32>
    %5 = tpu.matmul %3, %4, %cst {dimension_numbers = #tpu.dot_dimension_numbers<[1], [0], [0], [1], [0, 0, 1, 1], [], []>} : vector<8x128xf32>, vector<128x256xf32>, vector<8x256xf32> -> vector<8x256xf32>
    %6 = vector.extract_strided_slice %5 {offsets = [0, 0], sizes = [8, 128], strides = [1, 1]} : vector<8x256xf32> to vector<8x128xf32>
    %7 = vector.extract_strided_slice %5 {offsets = [0, 128], sizes = [8, 128], strides = [1, 1]} : vector<8x256xf32> to vector<8x128xf32>
    %8 = arith.negf %6 : vector<8x128xf32>
    %9 = math.exp %8 : vector<8x128xf32>
    %cst_4 = arith.constant 1.000000e+00 : f32
    %10 = vector.broadcast %cst_4 : f32 to vector<8x128xf32>
    %11 = arith.addf %10, %9 : vector<8x128xf32>
    %12 = arith.divf %10, %11 : vector<8x128xf32>
    %13 = arith.mulf %6, %12 : vector<8x128xf32>
    %14 = arith.mulf %13, %7 : vector<8x128xf32>
    %c0_5 = arith.constant 0 : index
    %c0_6 = arith.constant 0 : index
    %15 = vector.load %arg6[%c0_5, %c0_6] : memref<8x128xf32, #tpu.memory_space<vmem>>, vector<8x128xf32>
    %c0_7 = arith.constant 0 : index
    %c0_8 = arith.constant 0 : index
    %16 = vector.load %arg4[%c0_7, %c0_8] : memref<128x128xf32, #tpu.memory_space<vmem>>, vector<128x128xf32>
    %cst_9 = arith.constant dense<0.000000e+00> : vector<8x128xf32>
    %17 = tpu.matmul %14, %16, %cst_9 {dimension_numbers = #tpu.dot_dimension_numbers<[1], [0], [0], [1], [0, 0, 1, 1], [], []>} : vector<8x128xf32>, vector<128x128xf32>, vector<8x128xf32> -> vector<8x128xf32>
    %18 = arith.addf %15, %17 : vector<8x128xf32>
    %c0_10 = arith.constant 0 : index
    %c0_11 = arith.constant 0 : index
    %19 = vector.load %arg6[%c0_10, %c0_11] : memref<8x128xf32, #tpu.memory_space<vmem>>, vector<8x128xf32>
    tpu.vector_store %arg6[%c0_10, %c0_11], %18 {strides = array<i32>} : memref<8x128xf32, #tpu.memory_space<vmem>>, vector<8x128xf32>,
    %c2_i32 = arith.constant 2 : i32
    %20 = arith.cmpi eq, %arg1, %c2_i32 : i32
    %21 = arith.extui %20 : i1 to i32
    %c0_i32_12 = arith.constant 0 : i32
    %22 = arith.cmpi ne, %21, %c0_i32_12 : i32
    scf.if %22 {
      %c0_13 = arith.constant 0 : index
      %c0_14 = arith.constant 0 : index
      %23 = vector.load %arg6[%c0_13, %c0_14] : memref<8x128xf32, #tpu.memory_space<vmem>>, vector<8x128xf32>
      %c0_15 = arith.constant 0 : index
      %c0_16 = arith.constant 0 : index
      %24 = vector.load %arg5[%c0_15, %c0_16] : memref<8x128xf32, #tpu.memory_space<vmem>>, vector<8x128xf32>
      tpu.vector_store %arg5[%c0_15, %c0_16], %23 {strides = array<i32>} : memref<8x128xf32, #tpu.memory_space<vmem>>, vector<8x128xf32>,
    } else {
    }
    return
  }
  func.func @transform_0(%arg0: i32, %arg1: i32) -> (i32, i32) {
    %c0_i32 = arith.constant 0 : i32
    %c0_i32_0 = arith.constant 0 : i32
    return %arg0, %c0_i32 : i32, i32
  }
  func.func @transform_1(%arg0: i32, %arg1: i32) -> (i32, i32) {
    %c0_i32 = arith.constant 0 : i32
    %c0_i32_0 = arith.constant 0 : i32
    return %c0_i32, %arg1 : i32, i32
  }
  func.func @transform_2(%arg0: i32, %arg1: i32) -> (i32, i32) {
    %c0_i32 = arith.constant 0 : i32
    %c0_i32_0 = arith.constant 0 : i32
    return %arg1, %c0_i32 : i32, i32
  }
  func.func @transform_3(%arg0: i32, %arg1: i32) -> (i32, i32) {
    %c0_i32 = arith.constant 0 : i32
    %c0_i32_0 = arith.constant 0 : i32
    return %arg0, %c0_i32 : i32, i32
  }
}

</mosaic_0001>

<llo_original>
// kernel: tpu_custom_call.1
$region0: #{tpu_custom_call.1}
  #allocation0 [shape = 'u32[]', space=smem, size = 0x4, offset = 0x4, fixed_abs, tag = 'smem constant byte address 0x4 - core index']
  #allocation1 [shape = 'u32[72,128]{1,0:T(1,128)}', space=vmem, size = 0x9000, scoped, tag = 'internal scratch']
  #allocation2 [shape = 'f32[8,128]{1,0:T(8,128)}', space=vmem, size = 0x1000, scoped, tag = 'scratch operand']
  %s0 = inlined_call_operand.hbm [shape: f32[16,128], index: 0, kind: input, shape index: {}]
  %s1 = inlined_call_operand.hbm [shape: f32[128,768], index: 1, kind: input, shape index: {}]
  %s2 = inlined_call_operand.hbm [shape: f32[384,128], index: 2, kind: input, shape index: {}]
  %s3 = inlined_call_operand.hbm [shape: f32[16,128], index: 3, kind: output, shape index: {}]
  %s4 = sld [smem:[#allocation0]]
  $region65: #{tpu_custom_call.1} parent=0
    _
  %s6 = ssub.s32 1, %s4
  %s7 = scalar_select 0, %s6, %s4
  $region1: #{tpu_custom_call.1} parent=0
    #allocation3 [shape = 'u8[8192]{0}', space=vmem, size = 0x2000, scoped, tag = 'input window, operand 0']
    #allocation4 [shape = 's32[2]{0}', space=sflag, size = 0x8, scoped, tag = 'scoped memory for tpu_custom_call.1']
    #allocation5 [shape = 's32[2]{0}', space=sflag, size = 0x8, scoped, tag = 'scoped memory for tpu_custom_call.1']
    #allocation6 [shape = 'u8[262144]{0}', space=vmem, size = 0x40000, scoped, tag = 'input window, operand 1']
    #allocation7 [shape = 's32[2]{0}', space=sflag, size = 0x8, scoped, tag = 'scoped memory for tpu_custom_call.1']
    #allocation8 [shape = 'u8[131072]{0}', space=vmem, size = 0x20000, scoped, tag = 'input window, operand 2']
    #allocation9 [shape = 'u8[8192]{0}', space=vmem, size = 0x2000, scoped, tag = 'output window, operand 0']
    %8 = vsyncpa [#allocation4], 0
    %s9 = scalar_lea.sflag [#allocation4], 1
    %10 = vsyncpa %s9, 0
    %11 = vsyncpa [#allocation7], 0
    %s12 = scalar_lea.sflag [#allocation7], 1
    %13 = vsyncpa %s12, 0
    %14 = vsyncpa [#allocation5], 0
    %s15 = scalar_lea.sflag [#allocation5], 1
    %16 = vsyncpa %s15, 0
    loop: start=0, step=1, limit=8
    $region2: #{tpu_custom_call.1} parent=1 // loop_pre_header
      _
    $region3: #{tpu_custom_call.1} parent=1 // loop_header
      %s18 = sphi 0, %s22
      %p19 = scmp.ge.s32.totalorder %s18, 8
      %s25 = sphi 0, %s37
      %s26 = sphi 0, %s33
      %s27 = sphi 0, %s25
      %s28 = sphi 0, %s26
      %s29 = sphi 0, %s27
      %s30 = sphi 0, %s28
      %s40 = sphi 0, %s42
      %s43 = sphi 0, %s40
      %s44 = sphi 0, %s43
      %s60 = sphi 0, %s44
      %s66 = sphi 0, %s68
      %s69 = sphi 0, %s66
      %s70 = sphi 0, %s69
      %s86 = sphi 0, %s70
      %s92 = sphi 0, %s94
      %s95 = sphi 0, %s92
      %s96 = sphi 0, %s95
      %s112 = sphi 0, %s96
      %s118 = sphi 0, %s120
      %s121 = sphi 0, %s118
      %s122 = sphi 0, %s121
      %s138 = sphi 0, %s122
    $region4: #{tpu_custom_call.1} parent=1 // loop_header_branch
      %21 = sbr.rel (%p19) target = $region8
    $region5: #{tpu_custom_call.1} parent=1 // loop_body
      %s23 = ssub.s32 %s18, 1
      %s24 = ssub.s32 %s18, 2
      %s31 = sadd.s32 1, %s26
      %p32 = scmp.ge.s32.totalorder %s31, 3
      %s33 = scalar_select %p32, 0, %s31
      %s34 = sadd.s32 1, %s25
      %s35 = scalar_select %p32, %s34, %s25
      %p36 = scmp.ge.s32.totalorder %s35, 2
      %s37 = scalar_select %p36, 0, %s35
      %s38 = ssub.s32 %s25, %s37
      %p39 = scmp.eq.s32.totalorder %s38, 0
      %s41 = sadd.s32 %s40, 1
      %s42 = scalar_select %p39, %s40, %s41
      %p45 = pneg %p39
      %p46 = scmp.eq.s32.totalorder %s18, 5
      %p47 = por %p45, %p46
      %p48 = scmp.ne.s32.totalorder %s40, %s43
      %p49 = scmp.eq.s32.totalorder %s18, 0
      %p50 = por %p48, %p49
      %p51 = scmp.ne.s32.totalorder %s40, %s43
      %p52 = scmp.eq.s32.totalorder %s23, 5
      %p53 = por %p51, %p52
      %p54 = scmp.ne.s32.totalorder %s43, %s44
      %p55 = scmp.eq.s32.totalorder %s23, 0
      %p56 = por %p54, %p55
      %p57 = scmp.ne.s32.totalorder %s43, %s44
      %p58 = scmp.eq.s32.totalorder %s24, 5
      %p59 = por %p57, %p58
      %p61 = scmp.ne.s32.totalorder %s44, %s60
      %p62 = scmp.eq.s32.totalorder %s24, 0
      %p63 = por %p61, %p62
      %s64 = ssub.s32 %s26, %s33
      %p65 = scmp.eq.s32.totalorder %s64, 0
      %s67 = sadd.s32 %s66, 1
      %s68 = scalar_select %p65, %s66, %s67
      %p71 = pneg %p65
      %p72 = scmp.eq.s32.totalorder %s18, 5
      %p73 = por %p71, %p72
      %p74 = scmp.ne.s32.totalorder %s66, %s69
      %p75 = scmp.eq.s32.totalorder %s18, 0
      %p76 = por %p74, %p75
      %p77 = scmp.ne.s32.totalorder %s66, %s69
      %p78 = scmp.eq.s32.totalorder %s23, 5
      %p79 = por %p77, %p78
      %p80 = scmp.ne.s32.totalorder %s69, %s70
      %p81 = scmp.eq.s32.totalorder %s23, 0
      %p82 = por %p80, %p81
      %p83 = scmp.ne.s32.totalorder %s69, %s70
      %p84 = scmp.eq.s32.totalorder %s24, 5
      %p85 = por %p83, %p84
      %p87 = scmp.ne.s32.totalorder %s70, %s86
      %p88 = scmp.eq.s32.totalorder %s24, 0
      %p89 = por %p87, %p88
      %s90 = ssub.s32 %s26, %s33
      %p91 = scmp.eq.s32.totalorder %s90, 0
      %s93 = sadd.s32 %s92, 1
      %s94 = scalar_select %p91, %s92, %s93
      %p97 = pneg %p91
      %p98 = scmp.eq.s32.totalorder %s18, 5
      %p99 = por %p97, %p98
      %p100 = scmp.ne.s32.totalorder %s92, %s95
      %p101 = scmp.eq.s32.totalorder %s18, 0
      %p102 = por %p100, %p101
      %p103 = scmp.ne.s32.totalorder %s92, %s95
      %p104 = scmp.eq.s32.totalorder %s23, 5
      %p105 = por %p103, %p104
      %p106 = scmp.ne.s32.totalorder %s95, %s96
      %p107 = scmp.eq.s32.totalorder %s23, 0
      %p108 = por %p106, %p107
      %p109 = scmp.ne.s32.totalorder %s95, %s96
      %p110 = scmp.eq.s32.totalorder %s24, 5
      %p111 = por %p109, %p110
      %p113 = scmp.ne.s32.totalorder %s96, %s112
      %p114 = scmp.eq.s32.totalorder %s24, 0
      %p115 = por %p113, %p114
      %s116 = ssub.s32 %s25, %s37
      %p117 = scmp.eq.s32.totalorder %s116, 0
      %s119 = sadd.s32 %s118, 1
      %s120 = scalar_select %p117, %s118, %s119
      %p123 = pneg %p117
      %p124 = scmp.eq.s32.totalorder %s18, 5
      %p125 = por %p123, %p124
      %p126 = scmp.ne.s32.totalorder %s118, %s121
      %p127 = scmp.eq.s32.totalorder %s18, 0
      %p128 = por %p126, %p127
      %p129 = scmp.ne.s32.totalorder %s118, %s121
      %p130 = scmp.eq.s32.totalorder %s23, 5
      %p131 = por %p129, %p130
      %p132 = scmp.ne.s32.totalorder %s121, %s122
      %p133 = scmp.eq.s32.totalorder %s23, 0
      %p134 = por %p132, %p133
      %p135 = scmp.ne.s32.totalorder %s121, %s122
      %p136 = scmp.eq.s32.totalorder %s24, 5
      %p137 = por %p135, %p136
      %p139 = scmp.ne.s32.totalorder %s122, %s138
      %p140 = scmp.eq.s32.totalorder %s24, 0
      %p141 = por %p139, %p140
      %p142 = scmp.le.s32.totalorder 1, %s18
      %p143 = scmp.lt.s32.totalorder %s18, 7
      %p144 = pnand %p142, %p143
      %p145 = pneg %p144
      // Predicated region
      $region9: #{tpu_custom_call.1} parent=5 // pred_check
        _
      $region10: #{tpu_custom_call.1} parent=5 // pred_check_branch
        %147 = sbr.rel (%p144) target = $region12
      $region11: #{tpu_custom_call.1} parent=5 // pred_region
        %s148 = ssub.s32 %s18, 1
      $region12: #{tpu_custom_call.1} parent=5 // pred_fallthru
        _
      %p149 = scmp.lt.s32.totalorder %s18, 6
      // Predicated region
      $region13: #{tpu_custom_call.1} parent=5 // pred_check
        %p150 = pneg %p149
      $region14: #{tpu_custom_call.1} parent=5 // pred_check_branch
        %152 = sbr.rel (%p150) target = $region16
      $region15: #{tpu_custom_call.1} parent=5 // pred_region
        // Predicated region
        $region17: #{tpu_custom_call.1} parent=15 // pred_check
          %p153 = pneg %p50
        $region18: #{tpu_custom_call.1} parent=15 // pred_check_branch
          %155 = sbr.rel (%p153) target = $region20
        $region19: #{tpu_custom_call.1} parent=15 // pred_region
          %s156 = sand.u32 %s40, 1
          %s157 = scalar_lea.sflag [#allocation4], %s156
          %s158 = sand.u32 %s40, 1
          %s159 = smul.addr %s158, 8
          %s160 = scalar_lea.vmem [#allocation3], %s159
          %162 = vsyncadd %s157, 0
          %s163 = smul.addr %s25, 8
          %s164 = scalar_lea.hbm %s0, %s163
          %s166 = sshll.u32 %s164, 4
          %s167 = int_to_ptr.hbm [resolvable:$true] %s166
          %s168 = sshll.u32 %s160, 4
          %s169 = int_to_ptr.vmem [resolvable:$true] %s168
          %171 = dma.hbm_to_vmem [thread:$0]  %s167, 128, %s169, %s157
        $region20: #{tpu_custom_call.1} parent=15 // pred_fallthru
          _
        // Predicated region
        $region21: #{tpu_custom_call.1} parent=15 // pred_check
          %p172 = pneg %p76
        $region22: #{tpu_custom_call.1} parent=15 // pred_check_branch
          %174 = sbr.rel (%p172) target = $region24
        $region23: #{tpu_custom_call.1} parent=15 // pred_region
          %s175 = sand.u32 %s18, 1
          %s176 = scalar_lea.sflag [#allocation7], %s175
          %s177 = sand.u32 %s66, 1
          %s178 = smul.addr %s177, 256
          %s179 = scalar_lea.vmem [#allocation6], %s178
          %s180 = smul.u32 2, %s26
          %182 = vsyncadd %s176, 0
          %s183 = smul.addr %s180, 8
          %s184 = scalar_lea.hbm %s1, %s183
          %s185 = sshll.u32 %s184, 4
          %s186 = int_to_ptr.hbm [resolvable:$true] %s185
          %s187 = sshll.u32 %s179, 4
          %s188 = int_to_ptr.vmem [resolvable:$true] %s187
          %193 = dma.hbm_to_vmem [thread:$0]  %s186, 4096, %s188, %s176, 768, 256, 16
        $region24: #{tpu_custom_call.1} parent=15 // pred_fallthru
          _
        // Predicated region
        $region25: #{tpu_custom_call.1} parent=15 // pred_check
          %p194 = pneg %p102
        $region26: #{tpu_custom_call.1} parent=15 // pred_check_branch
          %196 = sbr.rel (%p194) target = $region28
        $region27: #{tpu_custom_call.1} parent=15 // pred_region
          %s197 = sand.u32 %s18, 1
          %s198 = scalar_lea.sflag [#allocation7], %s197
          %s199 = sand.u32 %s92, 1
          %s200 = smul.addr %s199, 128
          %s201 = scalar_lea.vmem [#allocation8], %s200
          %s202 = smul.u32 16, %s26
          %204 = vsyncadd %s198, 0
          %s205 = smul.addr %s202, 8
          %s206 = scalar_lea.hbm %s2, %s205
          %s207 = sshll.u32 %s206, 4
          %s208 = int_to_ptr.hbm [resolvable:$true] %s207
          %s209 = sshll.u32 %s201, 4
          %s210 = int_to_ptr.vmem [resolvable:$true] %s209
          %215 = dma.hbm_to_vmem [thread:$0]  %s208, 2048, %s210, %s198, 128, 128, 8
        $region28: #{tpu_custom_call.1} parent=15 // pred_fallthru
          _
      $region16: #{tpu_custom_call.1} parent=5 // pred_fallthru
        _
      %p216 = scmp.le.s32.totalorder 1, %s18
      %p217 = scmp.lt.s32.totalorder %s18, 7
      %p218 = pnand %p216, %p217
      %p219 = pneg %p218
      // Predicated region
      $region29: #{tpu_custom_call.1} parent=5 // pred_check
        _
      $region30: #{tpu_custom_call.1} parent=5 // pred_check_branch
        %221 = sbr.rel (%p218) target = $region32
      $region31: #{tpu_custom_call.1} parent=5 // pred_region
        %s222 = ssub.s32 %s18, 1
        %s223 = sand.u32 %s43, 1
        %s224 = scalar_lea.sflag [#allocation4], %s223
        %s225 = sand.u32 %s43, 1
        %s226 = smul.addr %s225, 8
        %s227 = scalar_lea.vmem [#allocation3], %s226
        // Predicated region
        $region33: #{tpu_custom_call.1} parent=31 // pred_check
          %p228 = pneg %p56
        $region34: #{tpu_custom_call.1} parent=31 // pred_check_branch
          %230 = sbr.rel (%p228) target = $region36
        $region35: #{tpu_custom_call.1} parent=31 // pred_region
          %232 = dma.done %s224, 128
        $region36: #{tpu_custom_call.1} parent=31 // pred_fallthru
          _
        %s233 = sand.u32 %s23, 1
        %s234 = scalar_lea.sflag [#allocation7], %s233
        %s235 = sand.u32 %s69, 1
        %s236 = smul.addr %s235, 256
        %s237 = scalar_lea.vmem [#allocation6], %s236
        // Predicated region
        $region37: #{tpu_custom_call.1} parent=31 // pred_check
          %p238 = pneg %p82
        $region38: #{tpu_custom_call.1} parent=31 // pred_check_branch
          %240 = sbr.rel (%p238) target = $region40
        $region39: #{tpu_custom_call.1} parent=31 // pred_region
          %242 = dma.done %s234, 4096
        $region40: #{tpu_custom_call.1} parent=31 // pred_fallthru
          _
        %s243 = sand.u32 %s23, 1
        %s244 = scalar_lea.sflag [#allocation7], %s243
        %s245 = sand.u32 %s95, 1
        %s246 = smul.addr %s245, 128
        %s247 = scalar_lea.vmem [#allocation8], %s246
        // Predicated region
        $region41: #{tpu_custom_call.1} parent=31 // pred_check
          %p248 = pneg %p108
        $region42: #{tpu_custom_call.1} parent=31 // pred_check_branch
          %250 = sbr.rel (%p248) target = $region44
        $region43: #{tpu_custom_call.1} parent=31 // pred_region
          %252 = dma.done %s244, 2048
        $region44: #{tpu_custom_call.1} parent=31 // pred_fallthru
          _
        %s253 = sand.u32 %s43, 1
        %s254 = scalar_lea.sflag [#allocation4], %s253
        %s255 = sand.u32 %s43, 1
        %s256 = smul.addr %s255, 8
        %s257 = scalar_lea.vmem [#allocation3], %s256
        %p258 = pneg %p56
        %p259 = pneg %p53
        %s260 = sand.u32 %s23, 1
        %s261 = scalar_lea.sflag [#allocation7], %s260
        %s262 = sand.u32 %s69, 1
        %s263 = smul.addr %s262, 256
        %s264 = scalar_lea.vmem [#allocation6], %s263
        %p265 = pneg %p82
        %p266 = pneg %p79
        %s267 = sand.u32 %s23, 1
        %s268 = scalar_lea.sflag [#allocation7], %s267
        %s269 = sand.u32 %s95, 1
        %s270 = smul.addr %s269, 128
        %s271 = scalar_lea.vmem [#allocation8], %s270
        %p272 = pneg %p108
        %p273 = pneg %p105
        %p274 = pneg %p134
        %p275 = pneg %p131
        %s276 = sand.u32 %s121, 1
        %s277 = scalar_lea.sflag [#allocation5], %s276
        %s278 = sand.u32 %s121, 1
        %s279 = smul.addr %s278, 8
        %s280 = scalar_lea.vmem [#allocation9], %s279
        %s281 = smul.u32 2, %s28
        %s282 = smul.u32 16, %s28
        %p283 = scmp.eq.s32.totalorder %s28, 0
        // Predicated region
        $region45: #{tpu_custom_call.1} parent=31 // pred_check
          %p284 = pneg %p283
        $region46: #{tpu_custom_call.1} parent=31 // pred_check_branch
          %286 = sbr.rel (%p284) target = $region48
        $region47: #{tpu_custom_call.1} parent=31 // pred_region
          %287 = vst [vmem:[#allocation2] sm:$0xff] 0.0
        $region48: #{tpu_custom_call.1} parent=31 // pred_fallthru
          _
        %v288 = vld [vmem:[%s227] sm:$0xff]
        %v289 = vld [vmem:[%s237] sm:$0xff]
        %v290 = vld [vmem:[%s237 + $0x8] sm:$0xff]
        %v291 = vld [vmem:[%s237 + $0x10] sm:$0xff]
        %v292 = vld [vmem:[%s237 + $0x18] sm:$0xff]
        %v293 = vld [vmem:[%s237 + $0x20] sm:$0xff]
        %v294 = vld [vmem:[%s237 + $0x28] sm:$0xff]
        %v295 = vld [vmem:[%s237 + $0x30] sm:$0xff]
        %v296 = vld [vmem:[%s237 + $0x38] sm:$0xff]
        %v297 = vld [vmem:[%s237 + $0x40] sm:$0xff]
        %v298 = vld [vmem:[%s237 + $0x48] sm:$0xff]
        %v299 = vld [vmem:[%s237 + $0x50] sm:$0xff]
        %v300 = vld [vmem:[%s237 + $0x58] sm:$0xff]
        %v301 = vld [vmem:[%s237 + $0x60] sm:$0xff]
        %v302 = vld [vmem:[%s237 + $0x68] sm:$0xff]
        %v303 = vld [vmem:[%s237 + $0x70] sm:$0xff]
        %v304 = vld [vmem:[%s237 + $0x78] sm:$0xff]
        %v305 = vld [vmem:[%s237 + $0x80] sm:$0xff]
        %v306 = vld [vmem:[%s237 + $0x88] sm:$0xff]
        %v307 = vld [vmem:[%s237 + $0x90] sm:$0xff]
        %v308 = vld [vmem:[%s237 + $0x98] sm:$0xff]
        %v309 = vld [vmem:[%s237 + $0xa0] sm:$0xff]
        %v310 = vld [vmem:[%s237 + $0xa8] sm:$0xff]
        %v311 = vld [vmem:[%s237 + $0xb0] sm:$0xff]
        %v312 = vld [vmem:[%s237 + $0xb8] sm:$0xff]
        %v313 = vld [vmem:[%s237 + $0xc0] sm:$0xff]
        %v314 = vld [vmem:[%s237 + $0xc8] sm:$0xff]
        %v315 = vld [vmem:[%s237 + $0xd0] sm:$0xff]
        %v316 = vld [vmem:[%s237 + $0xd8] sm:$0xff]
        %v317 = vld [vmem:[%s237 + $0xe0] sm:$0xff]
        %v318 = vld [vmem:[%s237 + $0xe8] sm:$0xff]
        %v319 = vld [vmem:[%s237 + $0xf0] sm:$0xff]
        %v320 = vld [vmem:[%s237 + $0xf8] sm:$0xff]
        %321 = vmatpush.msra.mxu0 %v319
        %322 = vmatpush.msra.mxu0 %v317
        %323 = vmatpush.msra.mxu0 %v315
        %324 = vmatpush.msra.mxu0 %v313
        %325 = vmatpush.msra.mxu0 %v311
        %326 = vmatpush.msra.mxu0 %v309
        %327 = vmatpush.msra.mxu0 %v307
        %328 = vmatpush.msra.mxu0 %v305
        %329 = vmatpush.msra.mxu0 %v303
        %330 = vmatpush.msra.mxu0 %v301
        %331 = vmatpush.msra.mxu0 %v299
        %332 = vmatpush.msra.mxu0 %v297
        %333 = vmatpush.msra.mxu0 %v295
        %334 = vmatpush.msra.mxu0 %v293
        %335 = vmatpush.msra.mxu0 %v291
        %336 = vmatpush.msra.mxu0 %v289
        %337 = vmatmul.f32.gmra.mxu0 %v288
        %v338 = vpop.f32.mrf.mxu0
        %v339 = vadd.f32 0.0, %v338
        %340 = vdwg.mxu0
        %341 = vmatpush.msra.mxu0 %v320
        %342 = vmatpush.msra.mxu0 %v318
        %343 = vmatpush.msra.mxu0 %v316
        %344 = vmatpush.msra.mxu0 %v314
        %345 = vmatpush.msra.mxu0 %v312
        %346 = vmatpush.msra.mxu0 %v310
        %347 = vmatpush.msra.mxu0 %v308
        %348 = vmatpush.msra.mxu0 %v306
        %349 = vmatpush.msra.mxu0 %v304
        %350 = vmatpush.msra.mxu0 %v302
        %351 = vmatpush.msra.mxu0 %v300
        %352 = vmatpush.msra.mxu0 %v298
        %353 = vmatpush.msra.mxu0 %v296
        %354 = vmatpush.msra.mxu0 %v294
        %355 = vmatpush.msra.mxu0 %v292
        %356 = vmatpush.msra.mxu0 %v290
        %357 = vmatmul.f32.gmra.mxu0 %v288
        %v358 = vpop.f32.mrf.mxu0
        %v359 = vadd.f32 0.0, %v358
        %360 = vdwg.mxu0
        %v361 = vxor.u32 %v339, 2147483648
        %v362 = vmul.f32 %v361, 1.442695
        %v363 = vpow.pop %v362
        %v364 = vadd.f32 %v363, 1.0
        %v365 = vrcp.pop %v364
        %v366 = vmul.f32 %v364, %v365
        %v367 = vsub.f32 1.0, %v366
        %v368 = vmul.f32 %v365, %v367
        %v369 = vadd.f32 %v365, %v368
        %vm370 = vweird.f32 %v364
        %vm371 = vweird.f32 %v365
        %vm372 = vmor %vm370, %vm371
        %v373 = vsel %vm372, %v365, %v369
        %v374 = vand.u32 2147483647, %v364
        %vm375 = vcmp.eq.f32.partialorder %v374, 8.507059e+37
        %v376 = vand.u32 %v364, 2147483648
        %v377 = vor.u32 1.1754944e-38, %v376
        %v378 = vsel %vm375, %v377, %v373
        %v379 = vmul.f32 1.0, %v378
        %v380 = vmul.f32 %v339, %v379
        %v381 = vmul.f32 %v380, %v359
        %v382 = vld [vmem:[#allocation2] sm:$0xff]
        %v383 = vld [vmem:[%s247] sm:$0xff]
        %v384 = vld [vmem:[%s247 + $0x8] sm:$0xff]
        %v385 = vld [vmem:[%s247 + $0x10] sm:$0xff]
        %v386 = vld [vmem:[%s247 + $0x18] sm:$0xff]
        %v387 = vld [vmem:[%s247 + $0x20] sm:$0xff]
        %v388 = vld [vmem:[%s247 + $0x28] sm:$0xff]
        %v389 = vld [vmem:[%s247 + $0x30] sm:$0xff]
        %v390 = vld [vmem:[%s247 + $0x38] sm:$0xff]
        %v391 = vld [vmem:[%s247 + $0x40] sm:$0xff]
        %v392 = vld [vmem:[%s247 + $0x48] sm:$0xff]
        %v393 = vld [vmem:[%s247 + $0x50] sm:$0xff]
        %v394 = vld [vmem:[%s247 + $0x58] sm:$0xff]
        %v395 = vld [vmem:[%s247 + $0x60] sm:$0xff]
        %v396 = vld [vmem:[%s247 + $0x68] sm:$0xff]
        %v397 = vld [vmem:[%s247 + $0x70] sm:$0xff]
        %v398 = vld [vmem:[%s247 + $0x78] sm:$0xff]
        %399 = vmatpush.msra.mxu0 %v398
        %400 = vmatpush.msra.mxu0 %v397
        %401 = vmatpush.msra.mxu0 %v396
        %402 = vmatpush.msra.mxu0 %v395
        %403 = vmatpush.msra.mxu0 %v394
        %404 = vmatpush.msra.mxu0 %v393
        %405 = vmatpush.msra.mxu0 %v392
        %406 = vmatpush.msra.mxu0 %v391
        %407 = vmatpush.msra.mxu0 %v390
        %408 = vmatpush.msra.mxu0 %v389
        %409 = vmatpush.msra.mxu0 %v388
        %410 = vmatpush.msra.mxu0 %v387
        %411 = vmatpush.msra.mxu0 %v386
        %412 = vmatpush.msra.mxu0 %v385
        %413 = vmatpush.msra.mxu0 %v384
        %414 = vmatpush.msra.mxu0 %v383
        %415 = vmatmul.f32.gmra.mxu0 %v381
        %v416 = vpop.f32.mrf.mxu0
        %v417 = vadd.f32 0.0, %v416
        %418 = vdwg.mxu0
        %v419 = vadd.f32 %v382, %v417
        %420 = vst [vmem:[#allocation2] sm:$0xff] %v419
        %p421 = scmp.eq.s32.totalorder %s28, 2
        // Predicated region
        $region49: #{tpu_custom_call.1} parent=31 // pred_check
          %p422 = pneg %p421
        $region50: #{tpu_custom_call.1} parent=31 // pred_check_branch
          %424 = sbr.rel (%p422) target = $region52
        $region51: #{tpu_custom_call.1} parent=31 // pred_region
          %v425 = vld [vmem:[#allocation2] sm:$0xff]
          %426 = vst [vmem:[%s280] sm:$0xff] %v425
        $region52: #{tpu_custom_call.1} parent=31 // pred_fallthru
          _
        %s427 = sand.u32 %s121, 1
        %s428 = scalar_lea.sflag [#allocation5], %s427
        %s429 = sand.u32 %s121, 1
        %s430 = smul.addr %s429, 8
        %s431 = scalar_lea.vmem [#allocation9], %s430
        // Predicated region
        $region53: #{tpu_custom_call.1} parent=31 // pred_check
          %p432 = pneg %p131
        $region54: #{tpu_custom_call.1} parent=31 // pred_check_branch
          %434 = sbr.rel (%p432) target = $region56
        $region55: #{tpu_custom_call.1} parent=31 // pred_region
          %436 = vsyncadd %s428, 0
          %s437 = smul.addr %s27, 8
          %s438 = scalar_lea.hbm %s3, %s437
          %s440 = sshll.u32 %s431, 4
          %s441 = int_to_ptr.vmem [resolvable:$true] %s440
          %s442 = sshll.u32 %s438, 4
          %s443 = int_to_ptr.hbm [resolvable:$true] %s442
          %445 = dma.vmem_to_hbm [thread:$0]  %s441, 128, %s443, %s428
        $region56: #{tpu_custom_call.1} parent=31 // pred_fallthru
          _
      $region32: #{tpu_custom_call.1} parent=5 // pred_fallthru
        _
      %p446 = scmp.le.s32.totalorder 2, %s18
      // Predicated region
      $region57: #{tpu_custom_call.1} parent=5 // pred_check
        %p447 = pneg %p446
      $region58: #{tpu_custom_call.1} parent=5 // pred_check_branch
        %449 = sbr.rel (%p447) target = $region60
      $region59: #{tpu_custom_call.1} parent=5 // pred_region
        %s450 = ssub.s32 %s18, 2
        // Predicated region
        $region61: #{tpu_custom_call.1} parent=59 // pred_check
          %p451 = pneg %p137
        $region62: #{tpu_custom_call.1} parent=59 // pred_check_branch
          %453 = sbr.rel (%p451) target = $region64
        $region63: #{tpu_custom_call.1} parent=59 // pred_region
          %s454 = sand.u32 %s122, 1
          %s455 = scalar_lea.sflag [#allocation5], %s454
          %s456 = sand.u32 %s122, 1
          %s457 = smul.addr %s456, 8
          %s458 = scalar_lea.vmem [#allocation9], %s457
          %460 = dma.done %s455, 128
        $region64: #{tpu_custom_call.1} parent=59 // pred_fallthru
          _
      $region60: #{tpu_custom_call.1} parent=5 // pred_fallthru
        _
    $region6: #{tpu_custom_call.1} parent=1 // loop_footer
      %s22 = sadd.s32 1, %s18
    $region7: #{tpu_custom_call.1} parent=1 // loop_footer_branch
      %17 = sbr.rel target = $region3
    $region8: #{tpu_custom_call.1} parent=1 // loop_exit
      _
    %461 = vsyncpa [#allocation4], 1
    %s462 = scalar_lea.sflag [#allocation4], 1
    %463 = vsyncpa %s462, 1
    %464 = vsyncpa [#allocation7], 1
    %s465 = scalar_lea.sflag [#allocation7], 1
    %466 = vsyncpa %s465, 1
    %467 = vsyncpa [#allocation5], 1
    %s468 = scalar_lea.sflag [#allocation5], 1
    %469 = vsyncpa %s468, 1

</llo_original>
